<compile_context>
chip_gen: v7x
topology: tpu7x:2x2x1
jax: 0.10.0
libtpu: 0.0.40
codegen_flags: <defaults>
</compile_context>

<pallas_src>
import functools
import math

import jax
import jax.numpy as jnp
from jax.experimental import pallas as pl
from jax.experimental.pallas import tpu as pltpu


def _round_up(x, m):
    return (x + m - 1) // m * m


def _vmem_capacity_bytes():
    """Physical VMEM capacity; conservative 64 MiB (v7x) fallback."""
    try:
        info = pltpu.get_tpu_info()
        cap = getattr(info, "vmem_capacity_bytes", None)
        if cap:
            return int(cap)
    except Exception:
        pass
    return 64 * 1024 * 1024


def _pick_tile_b(batch, cap_rows):
    """128-aligned batch tile minimizing padding waste, capped by VMEM budget."""
    cap_rows = max(8, int(cap_rows))
    if batch <= 128 or cap_rows < 128:
        return _round_up(min(batch, cap_rows), 8)
    cap = (cap_rows // 128) * 128
    best_t, best_pad = 128, _round_up(batch, 128)
    for t in range(128, cap + 1, 128):
        padded = _round_up(batch, t)
        if padded < best_pad or (padded == best_pad and t > best_t):
            best_t, best_pad = t, padded
    return best_t


# --------------------------------- kernel -----------------------------------

def _fused_lipmlp_kernel(*refs, n_layers, mxu_dtype):
    """refs = [x_tile, Wt_0..Wt_{L-1} (scale-folded), b_0..b_{L-1}, out_tile]."""
    x_ref = refs[0]
    wt_refs = refs[1:1 + n_layers]                  # each (Din_p, Dout_p)  VMEM, resident
    b_refs = refs[1 + n_layers:1 + 2 * n_layers]    # each (1, Dout_p)      VMEM, resident
    o_ref = refs[1 + 2 * n_layers]

    h = x_ref[...].astype(jnp.float32)              # (tile_b, D0_p)
    for li in range(n_layers):
        # Weights already carry the Lipschitz rescale and are pre-cast to the
        # MXU operand dtype; only the (small) activation tile is cast per step.
        y = jax.lax.dot_general(
            h.astype(mxu_dtype), wt_refs[li][...],
            dimension_numbers=(((1,), (0,)), ((), ())),
            preferred_element_type=jnp.float32)     # (tile_b, Dout_p) f32 accum
        y = y + b_refs[li][...]
        if li < n_layers - 1:
            y = jnp.maximum(y, 0.0)                 # fused ReLU
        h = y
    o_ref[...] = h.astype(o_ref.dtype)


# ----------------------- one-time layout plumbing ----------------------------

def prepare_lipmlp(params, *, mxu_dtype=jnp.bfloat16):
    """Fold the Lipschitz scale into the weights, pad to 128 lanes, transpose
    to (in, out), cast once to the MXU operand dtype.  Do this ONCE and reuse.

    params: list of (W(out,in), b(out,), c(1,)).  Returns (wts, bps, meta)."""
    n_layers = len(params)
    in_dim = params[0][0].shape[1]
    feat_dims = [in_dim] + [w.shape[0] for (w, _, _) in params]
    pad_dims = tuple(_round_up(d, 128) for d in feat_dims)

    wts, bps = [], []
    for li, (w, b, c) in enumerate(params):
        w = jnp.asarray(w, jnp.float32)
        b = jnp.asarray(b, jnp.float32)
        c = jnp.asarray(c, jnp.float32).reshape(())
        out_f, in_f = w.shape

        row_abs = jnp.sum(jnp.abs(w), axis=1)                         # (out_f,)
        lipc = jax.nn.softplus(c)
        scale = jnp.where(row_abs > 0.0,
                          jnp.minimum(lipc / row_abs, 1.0), 1.0)      # robust guard
        w_scaled = w * scale[:, None]                                 # fold in f32

        in_p, out_p = pad_dims[li], pad_dims[li + 1]
        wt = jnp.zeros((in_p, out_p), jnp.float32).at[:in_f, :out_f].set(w_scaled.T)
        wts.append(wt.astype(mxu_dtype))                              # single cast
        bps.append(jnp.zeros((1, out_p), jnp.float32).at[0, :out_f].set(b))

    meta = dict(n_layers=n_layers, in_dim=in_dim, out_dim=feat_dims[-1],
                pad_dims=pad_dims, mxu_dtype=mxu_dtype)
    return tuple(wts), tuple(bps), meta


# ------------------------------- forward ------------------------------------

def lipmlp_forward_prepared(x, wts, bps, *, n_layers, in_dim, out_dim, pad_dims,
                            mxu_dtype, tile_b=None, vmem_limit_bytes=None):
    batch = x.shape[0]
    assert x.shape[1] == in_dim
    f32 = jnp.float32

    d0, dl, dmax = pad_dims[0], pad_dims[-1], max(pad_dims)
    weight_bytes = sum(int(a.size) * a.dtype.itemsize for a in wts)
    weight_bytes += sum(int(a.size) * a.dtype.itemsize for a in bps)
    # per-row budget: double-buffered x/out tiles + f32 activation chain scratch
    per_row = 4 * (2 * d0 + 2 * dl + 2 * dmax)

    vmem_cap = _vmem_capacity_bytes()
    budget = int(vmem_cap * 0.85)
    if tile_b is None:
        avail = max(budget - weight_bytes - (4 << 20), per_row * 8)
        cap_rows = max(8, min(1024, avail // per_row))
        tile_b = _pick_tile_b(batch, cap_rows)
    b_pad = _round_up(batch, tile_b)
    if vmem_limit_bytes is None:
        vmem_limit_bytes = int(min(budget,
                                   max(32 << 20,
                                       weight_bytes + tile_b * per_row + (8 << 20))))

    # Only the batch input needs padding per call (weights already prepared).
    x_p = jnp.zeros((b_pad, d0), f32).at[:batch, :in_dim].set(x.astype(f32))

    grid = (b_pad // tile_b,)
    # Whole-array VMEM residents: single copy, no double buffering, no re-fetch.
    resident = pl.BlockSpec(memory_space=pltpu.MemorySpace.VMEM)
    in_specs = ([pl.BlockSpec((tile_b, d0), lambda i: (i, 0))]
                + [resident] * (2 * n_layers))
    out_specs = pl.BlockSpec((tile_b, dl), lambda i: (i, 0))

    kernel = functools.partial(_fused_lipmlp_kernel,
                               n_layers=n_layers, mxu_dtype=mxu_dtype)

    out_p = pl.pallas_call(
        kernel,
        out_shape=jax.ShapeDtypeStruct((b_pad, dl), x.dtype),
        grid_spec=pltpu.PrefetchScalarGridSpec(
            num_scalar_prefetch=0,
            grid=grid,
            in_specs=in_specs,
            out_specs=out_specs,
        ),
        compiler_params=pltpu.CompilerParams(
            dimension_semantics=("parallel",),
            vmem_limit_bytes=vmem_limit_bytes,
        ),
    )(x_p, *wts, *bps)

    return out_p[:batch, :out_dim]


def lipmlp_forward(x, params, *, mxu_dtype=jnp.bfloat16, tile_b=None):
    """Convenience one-shot wrapper (prepare + forward).  For repeated calls,
    call prepare_lipmlp once and jit lipmlp_forward_prepared instead."""
    wts, bps, meta = prepare_lipmlp(params, mxu_dtype=mxu_dtype)
    return lipmlp_forward_prepared(x, wts, bps, tile_b=tile_b, **meta)


# ----------------------- deterministic parameter init -----------------------

def init_lipmlp_params(key, dims):
    """Mirror LipschitzLinear.initialize_parameters:
       W ~ U(-stdv, stdv) (stand-in for init_fn), bias ~ U(-stdv, stdv),
       c = max_i sum_j |W[i, j]|."""
    params = []
    for ii in range(len(dims) - 1):
        in_f, out_f = dims[ii], dims[ii + 1]
        key, kw, kb = jax.random.split(key, 3)
        stdv = 1.0 / math.sqrt(in_f)
        w = jax.random.uniform(kw, (out_f, in_f), jnp.float32, -stdv, stdv)
        b = jax.random.uniform(kb, (out_f,), jnp.float32, -stdv, stdv)
        c = jnp.max(jnp.sum(jnp.abs(w), axis=1)).reshape(1)
        params.append((w, b, c))
    return params


# ------------------------------ pure-JAX reference ---------------------------

def lipmlp_reference(x, params, precision=None):
    n = len(params)
    for i, (w, b, c) in enumerate(params):
        lipc = jax.nn.softplus(c)                                   # (1,)
        scale = jnp.minimum(lipc / jnp.sum(jnp.abs(w), axis=1), 1.0)
        y = jnp.dot(x, (w * scale[:, None]).T, precision=precision) + b
        x = jnp.maximum(y, 0.0) if i < n - 1 else y
    return x


if __name__ == "__main__":
    # dims[0]=input dim, dims[1:-1]=hidden dims, dims[-1]=output dim (len >= 3)
    dims = (16, 64, 64, 8)
    batch = 32

    key = jax.random.PRNGKey(0)
    key, kx = jax.random.split(key)
    x = jax.random.normal(kx, (batch, dims[0]), jnp.float32)
    params = init_lipmlp_params(key, dims)

    ref_hi = lipmlp_reference(x, params, precision=jax.lax.Precision.HIGHEST)
    ref_def = lipmlp_reference(x, params, precision=None)

    # f32 MXU-operand path: tight check (two references differing only in the
    # backend's default f32 matmul precision so the tolerance stays small).
    wts32, bps32, meta32 = prepare_lipmlp(params, mxu_dtype=jnp.float32)
    fwd32 = jax.jit(functools.partial(lipmlp_forward_prepared, **meta32))
    out32 = jax.block_until_ready(fwd32(x, wts32, bps32))
    assert out32.shape == (batch, dims[-1]), out32.shape
    err = min(float(jnp.max(jnp.abs(out32 - ref_hi))),
              float(jnp.max(jnp.abs(out32 - ref_def))))
    assert err < 1e-4, err

    # Default bf16 MXU-operand path (full-rate MXU on v6e/v7x, f32 accumulation,
    # scale folded into the weights in f32 before the single bf16 cast).
    wts16, bps16, meta16 = prepare_lipmlp(params, mxu_dtype=jnp.bfloat16)
    fwd16 = jax.jit(functools.partial(lipmlp_forward_prepared, **meta16))
    out16 = jax.block_until_ready(fwd16(x, wts16, bps16))
    assert jnp.allclose(out16, ref_hi, atol=5e-2, rtol=5e-2), (
        float(jnp.max(jnp.abs(out16 - ref_hi))))

    print("KERNEL_OK")
</pallas_src>

<mosaic_0001>
module attributes {stable_mosaic.version = 11 : i64} {
  func.func @_fused_lipmlp_kernel(%arg0: i32, %arg1: memref<32x128xf32, #tpu.memory_space<vmem>>, %arg2: memref<128x128xf32, #tpu.memory_space<vmem>>, %arg3: memref<128x128xf32, #tpu.memory_space<vmem>>, %arg4: memref<128x128xf32, #tpu.memory_space<vmem>>, %arg5: memref<1x128xf32, #tpu.memory_space<vmem>>, %arg6: memref<1x128xf32, #tpu.memory_space<vmem>>, %arg7: memref<1x128xf32, #tpu.memory_space<vmem>>, %arg8: memref<32x128xf32, #tpu.memory_space<vmem>>) attributes {dimension_semantics = [#tpu.dimension_semantics<parallel>], iteration_bounds = array<i64: 1>, scalar_prefetch = 0 : i64, scratch_operands = 0 : i64, tpu.core_type = #tpu.core_type<tc>, window_params = [{transform_indices = @transform_0, window_bounds = array<i64: 32, 128>}, {pipeline_mode = #tpu.pipeline_mode<synchronous>, transform_indices = @transform_1, window_bounds = array<i64: 128, 128>}, {pipeline_mode = #tpu.pipeline_mode<synchronous>, transform_indices = @transform_2, window_bounds = array<i64: 128, 128>}, {pipeline_mode = #tpu.pipeline_mode<synchronous>, transform_indices = @transform_3, window_bounds = array<i64: 128, 128>}, {pipeline_mode = #tpu.pipeline_mode<synchronous>, transform_indices = @transform_4, window_bounds = array<i64: 1, 128>}, {pipeline_mode = #tpu.pipeline_mode<synchronous>, transform_indices = @transform_5, window_bounds = array<i64: 1, 128>}, {pipeline_mode = #tpu.pipeline_mode<synchronous>, transform_indices = @transform_6, window_bounds = array<i64: 1, 128>}, {transform_indices = @transform_7, window_bounds = array<i64: 32, 128>}]} {
    %c0 = arith.constant 0 : index
    %c0_0 = arith.constant 0 : index
    %0 = vector.load %arg1[%c0, %c0_0] : memref<32x128xf32, #tpu.memory_space<vmem>>, vector<32x128xf32>
    %c0_1 = arith.constant 0 : index
    %c0_2 = arith.constant 0 : index
    %1 = vector.load %arg2[%c0_1, %c0_2] : memref<128x128xf32, #tpu.memory_space<vmem>>, vector<128x128xf32>
    %cst = arith.constant dense<0.000000e+00> : vector<32x128xf32>
    %2 = tpu.matmul %0, %1, %cst {dimension_numbers = #tpu.dot_dimension_numbers<[1], [0], [0], [1], [0, 0, 1, 1], [], []>} : vector<32x128xf32>, vector<128x128xf32>, vector<32x128xf32> -> vector<32x128xf32>
    %c0_3 = arith.constant 0 : index
    %c0_4 = arith.constant 0 : index
    %3 = vector.load %arg5[%c0_3, %c0_4] : memref<1x128xf32, #tpu.memory_space<vmem>>, vector<1x128xf32>
    %4 = vector.broadcast %3 : vector<1x128xf32> to vector<32x128xf32>
    %5 = arith.addf %2, %4 : vector<32x128xf32>
    %cst_5 = arith.constant 0.000000e+00 : f32
    %6 = vector.broadcast %cst_5 : f32 to vector<32x128xf32>
    %7 = arith.maximumf %5, %6 : vector<32x128xf32>
    %c0_6 = arith.constant 0 : index
    %c0_7 = arith.constant 0 : index
    %8 = vector.load %arg3[%c0_6, %c0_7] : memref<128x128xf32, #tpu.memory_space<vmem>>, vector<128x128xf32>
    %cst_8 = arith.constant dense<0.000000e+00> : vector<32x128xf32>
    %9 = tpu.matmul %7, %8, %cst_8 {dimension_numbers = #tpu.dot_dimension_numbers<[1], [0], [0], [1], [0, 0, 1, 1], [], []>} : vector<32x128xf32>, vector<128x128xf32>, vector<32x128xf32> -> vector<32x128xf32>
    %c0_9 = arith.constant 0 : index
    %c0_10 = arith.constant 0 : index
    %10 = vector.load %arg6[%c0_9, %c0_10] : memref<1x128xf32, #tpu.memory_space<vmem>>, vector<1x128xf32>
    %11 = vector.broadcast %10 : vector<1x128xf32> to vector<32x128xf32>
    %12 = arith.addf %9, %11 : vector<32x128xf32>
    %cst_11 = arith.constant 0.000000e+00 : f32
    %13 = vector.broadcast %cst_11 : f32 to vector<32x128xf32>
    %14 = arith.maximumf %12, %13 : vector<32x128xf32>
    %c0_12 = arith.constant 0 : index
    %c0_13 = arith.constant 0 : index
    %15 = vector.load %arg4[%c0_12, %c0_13] : memref<128x128xf32, #tpu.memory_space<vmem>>, vector<128x128xf32>
    %cst_14 = arith.constant dense<0.000000e+00> : vector<32x128xf32>
    %16 = tpu.matmul %14, %15, %cst_14 {dimension_numbers = #tpu.dot_dimension_numbers<[1], [0], [0], [1], [0, 0, 1, 1], [], []>} : vector<32x128xf32>, vector<128x128xf32>, vector<32x128xf32> -> vector<32x128xf32>
    %c0_15 = arith.constant 0 : index
    %c0_16 = arith.constant 0 : index
    %17 = vector.load %arg7[%c0_15, %c0_16] : memref<1x128xf32, #tpu.memory_space<vmem>>, vector<1x128xf32>
    %18 = vector.broadcast %17 : vector<1x128xf32> to vector<32x128xf32>
    %19 = arith.addf %16, %18 : vector<32x128xf32>
    %c0_17 = arith.constant 0 : index
    %c0_18 = arith.constant 0 : index
    %20 = vector.load %arg8[%c0_17, %c0_18] : memref<32x128xf32, #tpu.memory_space<vmem>>, vector<32x128xf32>
    tpu.vector_store %arg8[%c0_17, %c0_18], %19 {strides = array<i32>} : memref<32x128xf32, #tpu.memory_space<vmem>>, vector<32x128xf32>,
    return
  }
  func.func @transform_0(%arg0: i32) -> (i32, i32) {
    %c0_i32 = arith.constant 0 : i32
    %c0_i32_0 = arith.constant 0 : i32
    return %arg0, %c0_i32 : i32, i32
  }
  func.func @transform_1(%arg0: i32) -> (i32, i32) {
    %c0_i32 = arith.constant 0 : i32
    %c0_i32_0 = arith.constant 0 : i32
    %c0_i32_1 = arith.constant 0 : i32
    return %c0_i32, %c0_i32_0 : i32, i32
  }
  func.func @transform_2(%arg0: i32) -> (i32, i32) {
    %c0_i32 = arith.constant 0 : i32
    %c0_i32_0 = arith.constant 0 : i32
    %c0_i32_1 = arith.constant 0 : i32
    return %c0_i32, %c0_i32_0 : i32, i32
  }
  func.func @transform_3(%arg0: i32) -> (i32, i32) {
    %c0_i32 = arith.constant 0 : i32
    %c0_i32_0 = arith.constant 0 : i32
    %c0_i32_1 = arith.constant 0 : i32
    return %c0_i32, %c0_i32_0 : i32, i32
  }
  func.func @transform_4(%arg0: i32) -> (i32, i32) {
    %c0_i32 = arith.constant 0 : i32
    %c0_i32_0 = arith.constant 0 : i32
    %c0_i32_1 = arith.constant 0 : i32
    return %c0_i32, %c0_i32_0 : i32, i32
  }
  func.func @transform_5(%arg0: i32) -> (i32, i32) {
    %c0_i32 = arith.constant 0 : i32
    %c0_i32_0 = arith.constant 0 : i32
    %c0_i32_1 = arith.constant 0 : i32
    return %c0_i32, %c0_i32_0 : i32, i32
  }
  func.func @transform_6(%arg0: i32) -> (i32, i32) {
    %c0_i32 = arith.constant 0 : i32
    %c0_i32_0 = arith.constant 0 : i32
    %c0_i32_1 = arith.constant 0 : i32
    return %c0_i32, %c0_i32_0 : i32, i32
  }
  func.func @transform_7(%arg0: i32) -> (i32, i32) {
    %c0_i32 = arith.constant 0 : i32
    %c0_i32_0 = arith.constant 0 : i32
    return %arg0, %c0_i32 : i32, i32
  }
}

</mosaic_0001>

<llo_original>
// kernel: lipmlp_forward_prepared.1
$region0: #{lipmlp_forward_prepared.1}
  #allocation0 [shape = 'u32[]', space=smem, size = 0x4, offset = 0x4, fixed_abs, tag = 'smem constant byte address 0x4 - core index']
  #allocation1 [shape = 'u32[144,128]{1,0:T(1,128)}', space=vmem, size = 0x12000, scoped, tag = 'internal scratch']
  %s0 = inlined_call_operand.vmem [shape: f32[32,128], index: 0, kind: input, shape index: {}]
  %s1 = inlined_call_operand.vmem [shape: f32[128,128], index: 1, kind: input, shape index: {}]
  %s2 = inlined_call_operand.hbm [shape: f32[128,128], index: 2, kind: input, shape index: {}]
  %s3 = inlined_call_operand.hbm [shape: f32[128,128], index: 3, kind: input, shape index: {}]
  %s4 = inlined_call_operand.vmem [shape: f32[1,128], index: 4, kind: input, shape index: {}]
  %s5 = inlined_call_operand.vmem [shape: f32[1,128], index: 5, kind: input, shape index: {}]
  %s6 = inlined_call_operand.vmem [shape: f32[1,128], index: 6, kind: input, shape index: {}]
  %s7 = inlined_call_operand.vmem [shape: f32[32,128], index: 7, kind: output, shape index: {}]
  %s8 = sld [smem:[#allocation0]]
  $region46: #{lipmlp_forward_prepared.1} parent=0
    _
  %s10 = ssub.s32 1, %s8
  %s11 = scalar_select 0, %s10, %s8
  $region1: #{lipmlp_forward_prepared.1} parent=0
    #allocation2 [shape = 'u8[65536]{0}', space=vmem, size = 0x10000, scoped, tag = 'input window, operand 2, single buffered']
    #allocation3 [shape = 's32[1]{0}', space=sflag, size = 0x4, scoped, tag = 'scoped memory for lipmlp_forward_prepared.1']
    #allocation4 [shape = 'u8[65536]{0}', space=vmem, size = 0x10000, scoped, tag = 'input window, operand 3, single buffered']
    #allocation5 [shape = 's32[1]{0}', space=sflag, size = 0x4, scoped, tag = 'scoped memory for lipmlp_forward_prepared.1']
    %12 = vsyncpa [#allocation3], 0
    %13 = vsyncpa [#allocation5], 0
    // Predicated region
    $region2: #{lipmlp_forward_prepared.1} parent=1 // pred_check
      _
    $region3: #{lipmlp_forward_prepared.1} parent=1 // pred_check_branch
      %15 = sbr.rel (0) target = $region5
    $region4: #{lipmlp_forward_prepared.1} parent=1 // pred_region
      _
    $region5: #{lipmlp_forward_prepared.1} parent=1 // pred_fallthru
      _
    // Predicated region
    $region6: #{lipmlp_forward_prepared.1} parent=1 // pred_check
      _
    $region7: #{lipmlp_forward_prepared.1} parent=1 // pred_check_branch
      %17 = sbr.rel (0) target = $region9
    $region8: #{lipmlp_forward_prepared.1} parent=1 // pred_region
      _
    $region9: #{lipmlp_forward_prepared.1} parent=1 // pred_fallthru
      _
    // Predicated region
    $region10: #{lipmlp_forward_prepared.1} parent=1 // pred_check
      _
    $region11: #{lipmlp_forward_prepared.1} parent=1 // pred_check_branch
      %19 = sbr.rel (0) target = $region13
    $region12: #{lipmlp_forward_prepared.1} parent=1 // pred_region
      %s21 = ssub.s32 2048, 2048
      %22 = vsyncadd [#allocation3], %s21
      %s23 = sshll.u32 [#allocation2], 4
      %s24 = int_to_ptr.vmem [resolvable:$true] %s23
      %29 = dma.hbm_to_vmem [thread:$0]  %s2, 2048, %s24, [#allocation3], 128, 128, 8
    $region13: #{lipmlp_forward_prepared.1} parent=1 // pred_fallthru
      _
    // Predicated region
    $region14: #{lipmlp_forward_prepared.1} parent=1 // pred_check
      _
    $region15: #{lipmlp_forward_prepared.1} parent=1 // pred_check_branch
      %31 = sbr.rel (0) target = $region17
    $region16: #{lipmlp_forward_prepared.1} parent=1 // pred_region
      %s33 = ssub.s32 2048, 2048
      %34 = vsyncadd [#allocation5], %s33
      %s35 = sshll.u32 [#allocation4], 4
      %s36 = int_to_ptr.vmem [resolvable:$true] %s35
      %41 = dma.hbm_to_vmem [thread:$0]  %s3, 2048, %s36, [#allocation5], 128, 128, 8
    $region17: #{lipmlp_forward_prepared.1} parent=1 // pred_fallthru
      _
    // Predicated region
    $region18: #{lipmlp_forward_prepared.1} parent=1 // pred_check
      _
    $region19: #{lipmlp_forward_prepared.1} parent=1 // pred_check_branch
      %43 = sbr.rel (0) target = $region21
    $region20: #{lipmlp_forward_prepared.1} parent=1 // pred_region
      _
    $region21: #{lipmlp_forward_prepared.1} parent=1 // pred_fallthru
      _
    // Predicated region
    $region22: #{lipmlp_forward_prepared.1} parent=1 // pred_check
      _
    $region23: #{lipmlp_forward_prepared.1} parent=1 // pred_check_branch
      %45 = sbr.rel (0) target = $region25
    $region24: #{lipmlp_forward_prepared.1} parent=1 // pred_region
      _
    $region25: #{lipmlp_forward_prepared.1} parent=1 // pred_fallthru
      _
    // Predicated region
    $region26: #{lipmlp_forward_prepared.1} parent=1 // pred_check
      _
    $region27: #{lipmlp_forward_prepared.1} parent=1 // pred_check_branch
      %47 = sbr.rel (0) target = $region29
    $region28: #{lipmlp_forward_prepared.1} parent=1 // pred_region
      _
    $region29: #{lipmlp_forward_prepared.1} parent=1 // pred_fallthru
      _
    // Predicated region
    $region30: #{lipmlp_forward_prepared.1} parent=1 // pred_check
      _
    $region31: #{lipmlp_forward_prepared.1} parent=1 // pred_check_branch
      %49 = sbr.rel (0) target = $region33
    $region32: #{lipmlp_forward_prepared.1} parent=1 // pred_region
      %50 = dma.done [#allocation3], 2048
    $region33: #{lipmlp_forward_prepared.1} parent=1 // pred_fallthru
      _
    // Predicated region
    $region34: #{lipmlp_forward_prepared.1} parent=1 // pred_check
      _
    $region35: #{lipmlp_forward_prepared.1} parent=1 // pred_check_branch
      %52 = sbr.rel (0) target = $region37
    $region36: #{lipmlp_forward_prepared.1} parent=1 // pred_region
      %53 = dma.done [#allocation5], 2048
    $region37: #{lipmlp_forward_prepared.1} parent=1 // pred_fallthru
      _
    %v54 = vld [vmem:[%s0] sm:$0xff]
    %v55 = vld [vmem:[%s0 + $0x8] sm:$0xff]
    %v56 = vld [vmem:[%s0 + $0x10] sm:$0xff]
    %v57 = vld [vmem:[%s0 + $0x18] sm:$0xff]
    %v58 = vld [vmem:[%s1] sm:$0xff]
    %v59 = vld [vmem:[%s1 + $0x8] sm:$0xff]
    %v60 = vld [vmem:[%s1 + $0x10] sm:$0xff]
    %v61 = vld [vmem:[%s1 + $0x18] sm:$0xff]
    %v62 = vld [vmem:[%s1 + $0x20] sm:$0xff]
    %v63 = vld [vmem:[%s1 + $0x28] sm:$0xff]
    %v64 = vld [vmem:[%s1 + $0x30] sm:$0xff]
    %v65 = vld [vmem:[%s1 + $0x38] sm:$0xff]
    %v66 = vld [vmem:[%s1 + $0x40] sm:$0xff]
    %v67 = vld [vmem:[%s1 + $0x48] sm:$0xff]
    %v68 = vld [vmem:[%s1 + $0x50] sm:$0xff]
    %v69 = vld [vmem:[%s1 + $0x58] sm:$0xff]
    %v70 = vld [vmem:[%s1 + $0x60] sm:$0xff]
    %v71 = vld [vmem:[%s1 + $0x68] sm:$0xff]
    %v72 = vld [vmem:[%s1 + $0x70] sm:$0xff]
    %v73 = vld [vmem:[%s1 + $0x78] sm:$0xff]
    %v74 = vld [vmem:[%s4] sm:$0x1]
    %v76 = vlaneseq
    %v77 = vshrl.u32 %v76, 7
    %v78 = vsub.s32 0, %v77
    %v79 = vrot.slane %v74, %v78
    %81 = vmatprep.subr.mxu0 0.0
    %82 = vmatpush1.msra.mxu0 %v58
    %83 = vmatprep.subr.mxu0 0.0
    %84 = vmatpush1.msra.mxu0 %v59
    %85 = vmatprep.subr.mxu0 0.0
    %86 = vmatpush1.msra.mxu0 %v60
    %87 = vmatprep.subr.mxu0 0.0
    %88 = vmatpush1.msra.mxu0 %v61
    %89 = vmatprep.subr.mxu0 0.0
    %90 = vmatpush1.msra.mxu0 %v62
    %91 = vmatprep.subr.mxu0 0.0
    %92 = vmatpush1.msra.mxu0 %v63
    %93 = vmatprep.subr.mxu0 0.0
    %94 = vmatpush1.msra.mxu0 %v64
    %95 = vmatprep.subr.mxu0 0.0
    %96 = vmatpush1.msra.mxu0 %v65
    %97 = vmatprep.subr.mxu0 0.0
    %98 = vmatpush1.msra.mxu0 %v66
    %99 = vmatprep.subr.mxu0 0.0
    %100 = vmatpush1.msra.mxu0 %v67
    %101 = vmatprep.subr.mxu0 0.0
    %102 = vmatpush1.msra.mxu0 %v68
    %103 = vmatprep.subr.mxu0 0.0
    %104 = vmatpush1.msra.mxu0 %v69
    %105 = vmatprep.subr.mxu0 0.0
    %106 = vmatpush1.msra.mxu0 %v70
    %107 = vmatprep.subr.mxu0 0.0
    %108 = vmatpush1.msra.mxu0 %v71
    %109 = vmatprep.subr.mxu0 0.0
    %110 = vmatpush1.msra.mxu0 %v72
    %111 = vmatprep.subr.mxu0 0.0
    %112 = vmatpush1.msra.mxu0 %v73
    %113 = vmatprep.subr.mxu0 0.0
    %114 = vmatpush1.msra.mxu0 0.0
    %115 = vmatprep.subr.mxu0 0.0
    %116 = vmatpush1.msra.mxu0 0.0
    %117 = vmatprep.subr.mxu0 0.0
    %118 = vmatpush1.msra.mxu0 0.0
    %119 = vmatprep.subr.mxu0 0.0
    %120 = vmatpush1.msra.mxu0 0.0
    %121 = vmatprep.subr.mxu0 0.0
    %122 = vmatpush1.msra.mxu0 0.0
    %123 = vmatprep.subr.mxu0 0.0
    %124 = vmatpush1.msra.mxu0 0.0
    %125 = vmatprep.subr.mxu0 0.0
    %126 = vmatpush1.msra.mxu0 0.0
    %127 = vmatprep.subr.mxu0 0.0
    %128 = vmatpush1.msra.mxu0 0.0
    %129 = vmatprep.subr.mxu0 0.0
    %130 = vmatpush1.msra.mxu0 0.0
    %131 = vmatprep.subr.mxu0 0.0
    %132 = vmatpush1.msra.mxu0 0.0
    %133 = vmatprep.subr.mxu0 0.0
    %134 = vmatpush1.msra.mxu0 0.0
    %135 = vmatprep.subr.mxu0 0.0
    %136 = vmatpush1.msra.mxu0 0.0
    %137 = vmatprep.subr.mxu0 0.0
    %138 = vmatpush1.msra.mxu0 0.0
    %139 = vmatprep.subr.mxu0 0.0
    %140 = vmatpush1.msra.mxu0 0.0
    %141 = vmatprep.subr.mxu0 0.0
    %142 = vmatpush1.msra.mxu0 0.0
    %143 = vmatprep.subr.mxu0 0.0
    %144 = vmatpush1.msra.mxu0 0.0
    %145 = vmatprep.mubr.f32.mxu0 0.0
    %146 = vmatmul.mubr.f32.gmra.mrb[0].mxu0 %v54
    %v147 = vpop.f32.mrb[0].mxu0
    %v148 = vadd.f32 %v79, %v147
    %v149 = vpop.f32.mrb[0].mxu0
    %150 = vmatprep.mubr.f32.mxu0 0.0
    %151 = vmatmul.mubr.f32.gmra.mrb[0].mxu0 %v55
    %v152 = vpop.f32.mrb[0].mxu0
    %v153 = vadd.f32 %v79, %v152
    %v154 = vpop.f32.mrb[0].mxu0
    %155 = vmatprep.mubr.f32.mxu0 0.0
    %156 = vmatmul.mubr.f32.gmra.mrb[0].mxu0 %v56
    %v157 = vpop.f32.mrb[0].mxu0
    %v158 = vadd.f32 %v79, %v157
    %v159 = vpop.f32.mrb[0].mxu0
    %160 = vmatprep.mubr.f32.mxu0 0.0
    %161 = vmatmul.mubr.f32.gmra.mrb[0].mxu0 %v57
    %v162 = vpop.f32.mrb[0].mxu0
    %v163 = vadd.f32 %v79, %v162
    %v164 = vpop.f32.mrb[0].mxu0
    %165 = vdwg.mxu0
    %v166 = vmax.f32 %v148, 0.0
    %v167 = vmax.f32 %v153, 0.0
    %v168 = vmax.f32 %v158, 0.0
    %v169 = vmax.f32 %v163, 0.0
    %v170 = vld [vmem:[#allocation2] sm:$0xff]
    %v171 = vld [vmem:[#allocation2 + $0x8] sm:$0xff]
    %v172 = vld [vmem:[#allocation2 + $0x10] sm:$0xff]
    %v173 = vld [vmem:[#allocation2 + $0x18] sm:$0xff]
    %v174 = vld [vmem:[#allocation2 + $0x20] sm:$0xff]
    %v175 = vld [vmem:[#allocation2 + $0x28] sm:$0xff]
    %v176 = vld [vmem:[#allocation2 + $0x30] sm:$0xff]
    %v177 = vld [vmem:[#allocation2 + $0x38] sm:$0xff]
    %v178 = vld [vmem:[#allocation2 + $0x40] sm:$0xff]
    %v179 = vld [vmem:[#allocation2 + $0x48] sm:$0xff]
    %v180 = vld [vmem:[#allocation2 + $0x50] sm:$0xff]
    %v181 = vld [vmem:[#allocation2 + $0x58] sm:$0xff]
    %v182 = vld [vmem:[#allocation2 + $0x60] sm:$0xff]
    %v183 = vld [vmem:[#allocation2 + $0x68] sm:$0xff]
    %v184 = vld [vmem:[#allocation2 + $0x70] sm:$0xff]
    %v185 = vld [vmem:[#allocation2 + $0x78] sm:$0xff]
    %v186 = vld [vmem:[%s5] sm:$0x1]
    %v188 = vlaneseq
    %v189 = vshrl.u32 %v188, 7
    %v190 = vsub.s32 0, %v189
    %v191 = vrot.slane %v186, %v190
    %193 = vmatprep.subr.mxu0 0.0
    %194 = vmatpush1.msra.mxu0 %v170
    %195 = vmatprep.subr.mxu0 0.0
    %196 = vmatpush1.msra.mxu0 %v171
    %197 = vmatprep.subr.mxu0 0.0
    %198 = vmatpush1.msra.mxu0 %v172
    %199 = vmatprep.subr.mxu0 0.0
    %200 = vmatpush1.msra.mxu0 %v173
    %201 = vmatprep.subr.mxu0 0.0
    %202 = vmatpush1.msra.mxu0 %v174
    %203 = vmatprep.subr.mxu0 0.0
    %204 = vmatpush1.msra.mxu0 %v175
    %205 = vmatprep.subr.mxu0 0.0
    %206 = vmatpush1.msra.mxu0 %v176
    %207 = vmatprep.subr.mxu0 0.0
    %208 = vmatpush1.msra.mxu0 %v177
    %209 = vmatprep.subr.mxu0 0.0
    %210 = vmatpush1.msra.mxu0 %v178
    %211 = vmatprep.subr.mxu0 0.0
    %212 = vmatpush1.msra.mxu0 %v179
    %213 = vmatprep.subr.mxu0 0.0
    %214 = vmatpush1.msra.mxu0 %v180
    %215 = vmatprep.subr.mxu0 0.0
    %216 = vmatpush1.msra.mxu0 %v181
    %217 = vmatprep.subr.mxu0 0.0
    %218 = vmatpush1.msra.mxu0 %v182
    %219 = vmatprep.subr.mxu0 0.0
    %220 = vmatpush1.msra.mxu0 %v183
    %221 = vmatprep.subr.mxu0 0.0
    %222 = vmatpush1.msra.mxu0 %v184
    %223 = vmatprep.subr.mxu0 0.0
    %224 = vmatpush1.msra.mxu0 %v185
    %225 = vmatprep.subr.mxu0 0.0
    %226 = vmatpush1.msra.mxu0 0.0
    %227 = vmatprep.subr.mxu0 0.0
    %228 = vmatpush1.msra.mxu0 0.0
    %229 = vmatprep.subr.mxu0 0.0
    %230 = vmatpush1.msra.mxu0 0.0
    %231 = vmatprep.subr.mxu0 0.0
    %232 = vmatpush1.msra.mxu0 0.0
    %233 = vmatprep.subr.mxu0 0.0
    %234 = vmatpush1.msra.mxu0 0.0
    %235 = vmatprep.subr.mxu0 0.0
    %236 = vmatpush1.msra.mxu0 0.0
    %237 = vmatprep.subr.mxu0 0.0
    %238 = vmatpush1.msra.mxu0 0.0
    %239 = vmatprep.subr.mxu0 0.0
    %240 = vmatpush1.msra.mxu0 0.0
    %241 = vmatprep.subr.mxu0 0.0
    %242 = vmatpush1.msra.mxu0 0.0
    %243 = vmatprep.subr.mxu0 0.0
    %244 = vmatpush1.msra.mxu0 0.0
    %245 = vmatprep.subr.mxu0 0.0
    %246 = vmatpush1.msra.mxu0 0.0
    %247 = vmatprep.subr.mxu0 0.0
    %248 = vmatpush1.msra.mxu0 0.0
    %249 = vmatprep.subr.mxu0 0.0
    %250 = vmatpush1.msra.mxu0 0.0
    %251 = vmatprep.subr.mxu0 0.0
    %252 = vmatpush1.msra.mxu0 0.0
    %253 = vmatprep.subr.mxu0 0.0
    %254 = vmatpush1.msra.mxu0 0.0
    %255 = vmatprep.subr.mxu0 0.0
    %256 = vmatpush1.msra.mxu0 0.0
    %257 = vmatprep.mubr.f32.mxu0 0.0
    %258 = vmatmul.mubr.f32.gmra.mrb[0].mxu0 %v166
    %v259 = vpop.f32.mrb[0].mxu0
    %v260 = vadd.f32 %v191, %v259
    %v261 = vpop.f32.mrb[0].mxu0
    %262 = vmatprep.mubr.f32.mxu0 0.0
    %263 = vmatmul.mubr.f32.gmra.mrb[0].mxu0 %v167
    %v264 = vpop.f32.mrb[0].mxu0
    %v265 = vadd.f32 %v191, %v264
    %v266 = vpop.f32.mrb[0].mxu0
    %267 = vmatprep.mubr.f32.mxu0 0.0
    %268 = vmatmul.mubr.f32.gmra.mrb[0].mxu0 %v168
    %v269 = vpop.f32.mrb[0].mxu0
    %v270 = vadd.f32 %v191, %v269
    %v271 = vpop.f32.mrb[0].mxu0
    %272 = vmatprep.mubr.f32.mxu0 0.0
    %273 = vmatmul.mubr.f32.gmra.mrb[0].mxu0 %v169
    %v274 = vpop.f32.mrb[0].mxu0
    %v275 = vadd.f32 %v191, %v274
    %v276 = vpop.f32.mrb[0].mxu0
    %277 = vdwg.mxu0
    %v278 = vmax.f32 %v260, 0.0
    %v279 = vmax.f32 %v265, 0.0
    %v280 = vmax.f32 %v270, 0.0
    %v281 = vmax.f32 %v275, 0.0
    %v282 = vld [vmem:[#allocation4] sm:$0xff]
    %v283 = vld [vmem:[#allocation4 + $0x8] sm:$0xff]
    %v284 = vld [vmem:[#allocation4 + $0x10] sm:$0xff]
    %v285 = vld [vmem:[#allocation4 + $0x18] sm:$0xff]
    %v286 = vld [vmem:[#allocation4 + $0x20] sm:$0xff]
    %v287 = vld [vmem:[#allocation4 + $0x28] sm:$0xff]
    %v288 = vld [vmem:[#allocation4 + $0x30] sm:$0xff]
    %v289 = vld [vmem:[#allocation4 + $0x38] sm:$0xff]
    %v290 = vld [vmem:[#allocation4 + $0x40] sm:$0xff]
    %v291 = vld [vmem:[#allocation4 + $0x48] sm:$0xff]
    %v292 = vld [vmem:[#allocation4 + $0x50] sm:$0xff]
    %v293 = vld [vmem:[#allocation4 + $0x58] sm:$0xff]
    %v294 = vld [vmem:[#allocation4 + $0x60] sm:$0xff]
    %v295 = vld [vmem:[#allocation4 + $0x68] sm:$0xff]
    %v296 = vld [vmem:[#allocation4 + $0x70] sm:$0xff]
    %v297 = vld [vmem:[#allocation4 + $0x78] sm:$0xff]
    %v298 = vld [vmem:[%s6] sm:$0x1]
    %v300 = vlaneseq
    %v301 = vshrl.u32 %v300, 7
    %v302 = vsub.s32 0, %v301
    %v303 = vrot.slane %v298, %v302
    %305 = vmatprep.subr.mxu0 0.0
    %306 = vmatpush1.msra.mxu0 %v282
    %307 = vmatprep.subr.mxu0 0.0
    %308 = vmatpush1.msra.mxu0 %v283
    %309 = vmatprep.subr.mxu0 0.0
    %310 = vmatpush1.msra.mxu0 %v284
    %311 = vmatprep.subr.mxu0 0.0
    %312 = vmatpush1.msra.mxu0 %v285
    %313 = vmatprep.subr.mxu0 0.0
    %314 = vmatpush1.msra.mxu0 %v286
    %315 = vmatprep.subr.mxu0 0.0
    %316 = vmatpush1.msra.mxu0 %v287
    %317 = vmatprep.subr.mxu0 0.0
    %318 = vmatpush1.msra.mxu0 %v288
    %319 = vmatprep.subr.mxu0 0.0
    %320 = vmatpush1.msra.mxu0 %v289
    %321 = vmatprep.subr.mxu0 0.0
    %322 = vmatpush1.msra.mxu0 %v290
    %323 = vmatprep.subr.mxu0 0.0
    %324 = vmatpush1.msra.mxu0 %v291
    %325 = vmatprep.subr.mxu0 0.0
    %326 = vmatpush1.msra.mxu0 %v292
    %327 = vmatprep.subr.mxu0 0.0
    %328 = vmatpush1.msra.mxu0 %v293
    %329 = vmatprep.subr.mxu0 0.0
    %330 = vmatpush1.msra.mxu0 %v294
    %331 = vmatprep.subr.mxu0 0.0
    %332 = vmatpush1.msra.mxu0 %v295
    %333 = vmatprep.subr.mxu0 0.0
    %334 = vmatpush1.msra.mxu0 %v296
    %335 = vmatprep.subr.mxu0 0.0
    %336 = vmatpush1.msra.mxu0 %v297
    %337 = vmatprep.subr.mxu0 0.0
    %338 = vmatpush1.msra.mxu0 0.0
    %339 = vmatprep.subr.mxu0 0.0
    %340 = vmatpush1.msra.mxu0 0.0
    %341 = vmatprep.subr.mxu0 0.0
    %342 = vmatpush1.msra.mxu0 0.0
    %343 = vmatprep.subr.mxu0 0.0
    %344 = vmatpush1.msra.mxu0 0.0
    %345 = vmatprep.subr.mxu0 0.0
    %346 = vmatpush1.msra.mxu0 0.0
    %347 = vmatprep.subr.mxu0 0.0
    %348 = vmatpush1.msra.mxu0 0.0
    %349 = vmatprep.subr.mxu0 0.0
    %350 = vmatpush1.msra.mxu0 0.0
    %351 = vmatprep.subr.mxu0 0.0
    %352 = vmatpush1.msra.mxu0 0.0
    %353 = vmatprep.subr.mxu0 0.0
    %354 = vmatpush1.msra.mxu0 0.0
    %355 = vmatprep.subr.mxu0 0.0
    %356 = vmatpush1.msra.mxu0 0.0
    %357 = vmatprep.subr.mxu0 0.0
    %358 = vmatpush1.msra.mxu0 0.0
    %359 = vmatprep.subr.mxu0 0.0
    %360 = vmatpush1.msra.mxu0 0.0
    %361 = vmatprep.subr.mxu0 0.0
    %362 = vmatpush1.msra.mxu0 0.0
    %363 = vmatprep.subr.mxu0 0.0
    %364 = vmatpush1.msra.mxu0 0.0
    %365 = vmatprep.subr.mxu0 0.0
    %366 = vmatpush1.msra.mxu0 0.0
    %367 = vmatprep.subr.mxu0 0.0
    %368 = vmatpush1.msra.mxu0 0.0
    %369 = vmatprep.mubr.f32.mxu0 0.0
    %370 = vmatmul.mubr.f32.gmra.mrb[0].mxu0 %v278
    %v371 = vpop.f32.mrb[0].mxu0
    %v372 = vadd.f32 %v303, %v371
    %v373 = vpop.f32.mrb[0].mxu0
    %374 = vmatprep.mubr.f32.mxu0 0.0
    %375 = vmatmul.mubr.f32.gmra.mrb[0].mxu0 %v279
    %v376 = vpop.f32.mrb[0].mxu0
    %v377 = vadd.f32 %v303, %v376
    %v378 = vpop.f32.mrb[0].mxu0
    %379 = vmatprep.mubr.f32.mxu0 0.0
    %380 = vmatmul.mubr.f32.gmra.mrb[0].mxu0 %v280
    %v381 = vpop.f32.mrb[0].mxu0
    %v382 = vadd.f32 %v303, %v381
    %v383 = vpop.f32.mrb[0].mxu0
    %384 = vmatprep.mubr.f32.mxu0 0.0
    %385 = vmatmul.mubr.f32.gmra.mrb[0].mxu0 %v281
    %v386 = vpop.f32.mrb[0].mxu0
    %v387 = vadd.f32 %v303, %v386
    %v388 = vpop.f32.mrb[0].mxu0
    %389 = vdwg.mxu0
    %390 = vst [vmem:[%s7] sm:$0xff] %v372
    %391 = vst [vmem:[%s7 + $0x8] sm:$0xff] %v377
    %392 = vst [vmem:[%s7 + $0x10] sm:$0xff] %v382
    %393 = vst [vmem:[%s7 + $0x18] sm:$0xff] %v387
    // Predicated region
    $region38: #{lipmlp_forward_prepared.1} parent=1 // pred_check
      _
    $region39: #{lipmlp_forward_prepared.1} parent=1 // pred_check_branch
      %395 = sbr.rel (0) target = $region41
    $region40: #{lipmlp_forward_prepared.1} parent=1 // pred_region
      _
    $region41: #{lipmlp_forward_prepared.1} parent=1 // pred_fallthru
      _
    // Predicated region
    $region42: #{lipmlp_forward_prepared.1} parent=1 // pred_check
      _
    $region43: #{lipmlp_forward_prepared.1} parent=1 // pred_check_branch
      %397 = sbr.rel (0) target = $region45
    $region44: #{lipmlp_forward_prepared.1} parent=1 // pred_region
      _
    $region45: #{lipmlp_forward_prepared.1} parent=1 // pred_fallthru
      _
    %398 = vsyncpa [#allocation3], 1
    %399 = vsyncpa [#allocation5], 1

</llo_original>
